<compile_context>
chip_gen: v5e
topology: v5e:2x2
jax: 0.10.0
libtpu: 0.0.40
codegen_flags: <defaults>
</compile_context>

<pallas_src>
import functools

import jax
import jax.numpy as jnp
from jax.experimental import pallas as pl
from jax.experimental.pallas import tpu as pltpu


# --------------------------------------------------------------------------
# Generation-aware VMEM budgets
# --------------------------------------------------------------------------
@functools.lru_cache(maxsize=1)
def _tpu_config():
    """Returns (vmem_limit_bytes, stream_budget_bytes, row_cap, is_v5e)."""
    vmem_cap = None
    try:
        vmem_cap = int(pltpu.get_tpu_info().vmem_capacity_bytes)
    except Exception:
        vmem_cap = None
    kind = ""
    try:
        kind = jax.devices()[0].device_kind.lower()
    except Exception:
        pass
    is_v5e = ("v5 lite" in kind) or ("v5e" in kind) or ("v5litepod" in kind)
    if vmem_cap is None:
        if any(t in kind for t in ("v4", "v5", "v6")):
            vmem_cap = 128 * 1024 * 1024
        else:                                   # v7x-class / unknown: 64 MiB
            vmem_cap = 64 * 1024 * 1024
    big_vmem = vmem_cap >= 100 * 1024 * 1024
    vmem_limit = (96 if big_vmem else 48) * 1024 * 1024
    vmem_limit = min(vmem_limit,
                     max(vmem_cap - 16 * 1024 * 1024, 16 * 1024 * 1024))
    stream_budget = (64 if big_vmem else 32) * 1024 * 1024
    stream_budget = min(stream_budget, vmem_limit * 3 // 4)
    row_cap = 1024 if big_vmem else 256          # v7x: keep grid depth for 2 TCs
    return vmem_limit, stream_budget, row_cap, is_v5e


# --------------------------------------------------------------------------
# Kernel 1: mod = silu(emb) @ W^T + b, tiled over the output dim
# --------------------------------------------------------------------------
def _silu_linear_kernel(e_ref, w_ref, b_ref, o_ref):
    e = e_ref[...].astype(jnp.float32)
    h = (e * jax.lax.logistic(e)).astype(w_ref.dtype)       # silu on the EUP
    # Weight stays in PyTorch (out, in) layout -> contract on its last dim.
    # bf16 weights use the native bf16 MXU path; HIGHEST only for f32 weights
    # (no VMEM up-cast there, and the kernel is weight-bandwidth-bound).
    prec = (jax.lax.Precision.HIGHEST if w_ref.dtype == jnp.float32
            else jax.lax.Precision.DEFAULT)
    y = jax.lax.dot_general(h, w_ref[...],
                            dimension_numbers=(((1,), (1,)), ((), ())),
                            preferred_element_type=jnp.float32,
                            precision=prec)
    o_ref[...] = (y + b_ref[...].astype(jnp.float32)).astype(o_ref.dtype)


def _choose_tile_n(out_dim, d, itemsize, budget):
    """Largest lane-aligned N tile whose double-buffered weight slab fits."""
    if out_dim <= 512:
        return out_dim                           # tiny problem: one block
    tn = budget // max(1, 2 * d * itemsize)      # 2x-buffered (TILE_N, D) slab
    tn = max(128, (tn // 128) * 128)
    tn = min(tn, 1024)
    return out_dim if tn >= out_dim else tn


def _silu_linear(emb, weight, bias):
    """emb: (B, D); weight: (out_dim, D) [PyTorch layout]; bias: (out_dim,)."""
    b_, d = emb.shape
    out_dim = weight.shape[0]
    vmem_limit, stream_budget, _, _ = _tpu_config()
    w_itemsize = jnp.dtype(weight.dtype).itemsize
    tile_n = _choose_tile_n(out_dim, d, w_itemsize, stream_budget // 2)
    grid = (pl.cdiv(out_dim, tile_n),)

    bias2 = bias.reshape(1, out_dim)

    cost = pl.CostEstimate(
        flops=2 * b_ * d * out_dim,
        transcendentals=b_ * d,
        bytes_accessed=out_dim * d * w_itemsize
        + b_ * d * jnp.dtype(emb.dtype).itemsize
        + (b_ + 1) * out_dim * w_itemsize,
    )

    return pl.pallas_call(
        _silu_linear_kernel,
        out_shape=jax.ShapeDtypeStruct((b_, out_dim), emb.dtype),
        grid_spec=pltpu.PrefetchScalarGridSpec(
            num_scalar_prefetch=0,
            grid=grid,
            in_specs=[
                pl.BlockSpec((b_, d), lambda n: (0, 0)),       # emb, resident
                pl.BlockSpec((tile_n, d), lambda n: (n, 0)),   # weight slab
                pl.BlockSpec((1, tile_n), lambda n: (0, n)),   # bias slab
            ],
            out_specs=pl.BlockSpec((b_, tile_n), lambda n: (0, n)),
        ),
        compiler_params=pltpu.CompilerParams(
            dimension_semantics=("parallel",),
            vmem_limit_bytes=vmem_limit),
        cost_estimate=cost,
    )(emb, weight, bias2)


# --------------------------------------------------------------------------
# Kernel 2: fused LayerNorm (no affine) + n_out adaptive modulations
# --------------------------------------------------------------------------
def _norm_mod_kernel(x_ref, mod_ref, *out_refs, chunk_idx, eps, low_precision):
    # x_ref:   (1, tile_rows, D)
    # mod_ref: (1, mult, D)  -- all modulation vectors for this batch row
    x = x_ref[...].astype(jnp.float32)
    mean = jnp.mean(x, axis=-1, keepdims=True)
    xc = x - mean
    var = jnp.mean(xc * xc, axis=-1, keepdims=True)
    nx = xc * jax.lax.rsqrt(var + eps)                 # LayerNorm, affine=False

    mod = mod_ref[...]
    if low_precision:
        # bf16 modulation (v6e / v7x): halves VALU work on the big stream;
        # normalization statistics above stay in f32.
        nx_c = nx.astype(out_refs[0].dtype)
        for j, (sc, sh) in enumerate(chunk_idx):
            scale = mod[:, sc:sc + 1, :].astype(out_refs[j].dtype)
            shift = mod[:, sh:sh + 1, :].astype(out_refs[j].dtype)
            out_refs[j][...] = (nx_c * (1 + scale) + shift).astype(out_refs[j].dtype)
    else:
        mod_f = mod.astype(jnp.float32)
        for j, (sc, sh) in enumerate(chunk_idx):
            scale = mod_f[:, sc:sc + 1, :]
            shift = mod_f[:, sh:sh + 1, :]
            out_refs[j][...] = (nx * (1.0 + scale) + shift).astype(out_refs[j].dtype)


def _choose_tile_rows(seq, d, itemsize, n_out, budget, row_cap):
    """Row tile sized to fit the double-buffered native-dtype streams PLUS the
    live f32 temporaries created inside the kernel, capped for grid depth."""
    pack = {4: 8, 2: 16, 1: 32}.get(itemsize, 8)
    bytes_per_row = d * (2 * itemsize * (1 + n_out)      # 2x-buffered x + outs
                         + 4 * (3 + n_out))              # f32: x, xc/nx, temps
    rows = budget // max(1, bytes_per_row)
    rows = max(pack, (rows // pack) * pack)
    rows = min(rows, row_cap)
    padded_seq = ((seq + pack - 1) // pack) * pack
    return min(rows, padded_seq)


def _norm_modulate(x, mod3, chunk_idx, eps):
    """x: (B, S, D); mod3: (B, mult, D); chunk_idx: ((scale_i, shift_i), ...)."""
    b, s, d = x.shape
    mult = mod3.shape[1]
    n_out = len(chunk_idx)
    itemsize = jnp.dtype(x.dtype).itemsize
    vmem_limit, stream_budget, row_cap, is_v5e = _tpu_config()
    tile_rows = _choose_tile_rows(s, d, itemsize, n_out, stream_budget, row_cap)
    grid = (b, pl.cdiv(s, tile_rows))

    low_precision = (itemsize == 2) and (not is_v5e)

    x_spec = pl.BlockSpec((1, tile_rows, d), lambda bi, ti: (bi, ti, 0))
    mod_spec = pl.BlockSpec((1, mult, d), lambda bi, ti: (bi, 0, 0))
    out_spec = pl.BlockSpec((1, tile_rows, d), lambda bi, ti: (bi, ti, 0))

    cost = pl.CostEstimate(
        flops=(7 + 3 * n_out) * b * s * d,
        transcendentals=b * s,
        bytes_accessed=(1 + n_out) * b * s * d * itemsize
        + b * mult * d * jnp.dtype(mod3.dtype).itemsize,
    )

    kernel = functools.partial(_norm_mod_kernel, chunk_idx=tuple(chunk_idx),
                               eps=eps, low_precision=low_precision)

    outs = pl.pallas_call(
        kernel,
        out_shape=tuple(jax.ShapeDtypeStruct((b, s, d), x.dtype)
                        for _ in range(n_out)),
        grid_spec=pltpu.PrefetchScalarGridSpec(
            num_scalar_prefetch=0,
            grid=grid,
            in_specs=[x_spec, mod_spec],
            out_specs=tuple(out_spec for _ in range(n_out)),
        ),
        compiler_params=pltpu.CompilerParams(
            dimension_semantics=("parallel", "parallel"),
            vmem_limit_bytes=vmem_limit),
        cost_estimate=cost,
    )(x, mod3)

    if not isinstance(outs, (list, tuple)):
        outs = (outs,)
    return tuple(outs)


# --------------------------------------------------------------------------
# Module-level wrapper: matches AdaLayerNorm.forward
# --------------------------------------------------------------------------
def ada_layer_norm(x, emb, weight, bias, *, single=False, dual=False, eps=1e-6):
    """x: (B, S, D), emb: (B, D), weight: (mult*D, D) [nn.Linear layout]."""
    assert x.ndim == 3, "x must be (batch, seq, dim)"
    b, s, d = x.shape
    mult = 9 if dual else (2 if single else 6)
    assert weight.shape == (mult * d, d)
    assert emb.shape == (b, d)

    mod = _silu_linear(emb, weight, bias)           # (B, mult*D)
    mod3 = mod.reshape(b, mult, d)                  # free row-major reshape

    if single:
        # chunks: [scale, shift]
        (out,) = _norm_modulate(x, mod3, ((0, 1),), eps)
        return out
    elif dual:
        # chunks: [shift_msa, scale_msa, gate_msa, shift_mlp, scale_mlp,
        #          gate_mlp, shift_msa2, scale_msa2, gate_msa2]
        out1, out2 = _norm_modulate(x, mod3, ((1, 0), (7, 6)), eps)
        return (out1, mod3[:, 2:3, :], mod3[:, 3:4, :], mod3[:, 4:5, :],
                mod3[:, 5:6, :], out2, mod3[:, 8:9, :])
    else:
        # chunks: [shift_msa, scale_msa, gate_msa, shift_mlp, scale_mlp, gate_mlp]
        (out,) = _norm_modulate(x, mod3, ((1, 0),), eps)
        return (out, mod3[:, 2:3, :], mod3[:, 3:4, :], mod3[:, 4:5, :],
                mod3[:, 5:6, :])


# --------------------------------------------------------------------------
# Pure-JAX reference (mirrors the PyTorch forward)
# --------------------------------------------------------------------------
def ada_layer_norm_reference(x, emb, weight, bias, *, single=False, dual=False,
                             eps=1e-6):
    d = x.shape[-1]
    prec = (jax.lax.Precision.HIGHEST if weight.dtype == jnp.float32
            else jax.lax.Precision.DEFAULT)
    h = jax.nn.silu(emb.astype(jnp.float32)).astype(weight.dtype)
    mod = (jnp.dot(h, weight.T, precision=prec,
                   preferred_element_type=jnp.float32)
           + bias.astype(jnp.float32)).astype(emb.dtype)
    mult = mod.shape[-1] // d
    mod3 = mod.reshape(emb.shape[0], mult, d)

    xf = x.astype(jnp.float32)
    mean = xf.mean(-1, keepdims=True)
    xc = xf - mean
    var = (xc * xc).mean(-1, keepdims=True)
    nx = xc * jax.lax.rsqrt(var + eps)

    def chunk(i):
        return mod3[:, i:i + 1, :]

    def modulate(scale_i, shift_i):
        y = (nx * (1.0 + chunk(scale_i).astype(jnp.float32))
             + chunk(shift_i).astype(jnp.float32))
        return y.astype(x.dtype)

    if single:
        return modulate(0, 1)
    elif dual:
        return (modulate(1, 0), chunk(2), chunk(3), chunk(4), chunk(5),
                modulate(7, 6), chunk(8))
    else:
        return (modulate(1, 0), chunk(2), chunk(3), chunk(4), chunk(5))


if __name__ == "__main__":
    key = jax.random.PRNGKey(0)
    batch, seq, dim = 2, 8, 32
    eps = 1e-6
    kx, ke, kw, kb = jax.random.split(key, 4)

    def run_case(dtype, single, dual, atol, rtol):
        mult = 9 if dual else (2 if single else 6)
        x = jax.random.normal(kx, (batch, seq, dim), dtype=jnp.float32).astype(dtype)
        emb = jax.random.normal(ke, (batch, dim), dtype=jnp.float32).astype(dtype)
        w = (0.05 * jax.random.normal(kw, (mult * dim, dim),
                                      dtype=jnp.float32)).astype(dtype)
        b = (0.05 * jax.random.normal(kb, (mult * dim,),
                                      dtype=jnp.float32)).astype(dtype)

        out = ada_layer_norm(x, emb, w, b, single=single, dual=dual, eps=eps)
        out = jax.block_until_ready(out)
        ref = ada_layer_norm_reference(x, emb, w, b, single=single, dual=dual,
                                       eps=eps)

        out_leaves = jax.tree_util.tree_leaves(out)
        ref_leaves = jax.tree_util.tree_leaves(ref)
        assert len(out_leaves) == len(ref_leaves)
        for o, r in zip(out_leaves, ref_leaves):
            assert o.shape == r.shape, (o.shape, r.shape)
            of = o.astype(jnp.float32)
            rf = r.astype(jnp.float32)
            err = float(jnp.max(jnp.abs(of - rf)))
            assert jnp.allclose(of, rf, atol=atol, rtol=rtol), err

    # f32: default, single, and dual variants
    for single, dual in ((False, False), (True, False), (False, True)):
        run_case(jnp.float32, single, dual, atol=1e-5, rtol=1e-5)

    # bf16: exercises the native bf16 MXU matmul + bf16 modulation path
    run_case(jnp.bfloat16, False, False, atol=3e-2, rtol=3e-2)

    print("KERNEL_OK")
</pallas_src>

<mosaic_0001>
module attributes {stable_mosaic.version = 11 : i64} {
  func.func @_silu_linear_kernel(%arg0: i32, %arg1: memref<2x32xf32, #tpu.memory_space<vmem>>, %arg2: memref<192x32xf32, #tpu.memory_space<vmem>>, %arg3: memref<1x192xf32, #tpu.memory_space<vmem>>, %arg4: memref<2x192xf32, #tpu.memory_space<vmem>>) attributes {dimension_semantics = [#tpu.dimension_semantics<parallel>], iteration_bounds = array<i64: 1>, scalar_prefetch = 0 : i64, scratch_operands = 0 : i64, tpu.core_type = #tpu.core_type<tc>, window_params = [{pipeline_mode = #tpu.pipeline_mode<synchronous>, transform_indices = @transform_0, window_bounds = array<i64: 2, 32>}, {transform_indices = @transform_1, window_bounds = array<i64: 192, 32>}, {transform_indices = @transform_2, window_bounds = array<i64: 1, 192>}, {transform_indices = @transform_3, window_bounds = array<i64: 2, 192>}]} {
    %c0 = arith.constant 0 : index
    %c0_0 = arith.constant 0 : index
    %0 = vector.load %arg1[%c0, %c0_0] : memref<2x32xf32, #tpu.memory_space<vmem>>, vector<2x32xf32>
    %1 = arith.negf %0 : vector<2x32xf32>
    %2 = math.exp %1 : vector<2x32xf32>
    %cst = arith.constant 1.000000e+00 : f32
    %3 = vector.broadcast %cst : f32 to vector<2x32xf32>
    %4 = arith.addf %3, %2 : vector<2x32xf32>
    %5 = arith.divf %3, %4 : vector<2x32xf32>
    %6 = arith.mulf %0, %5 : vector<2x32xf32>
    %c0_1 = arith.constant 0 : index
    %c0_2 = arith.constant 0 : index
    %7 = vector.load %arg2[%c0_1, %c0_2] : memref<192x32xf32, #tpu.memory_space<vmem>>, vector<192x32xf32>
    %cst_3 = arith.constant dense<0.000000e+00> : vector<2x192xf32>
    %8 = tpu.matmul %6, %7, %cst_3 {dimension_numbers = #tpu.dot_dimension_numbers<[1], [1], [0], [0], [0, 0, 1, 0], [], []>, precision = #tpu.contract_precision<fp32>} : vector<2x32xf32>, vector<192x32xf32>, vector<2x192xf32> -> vector<2x192xf32>
    %c0_4 = arith.constant 0 : index
    %c0_5 = arith.constant 0 : index
    %9 = vector.load %arg3[%c0_4, %c0_5] : memref<1x192xf32, #tpu.memory_space<vmem>>, vector<1x192xf32>
    %10 = vector.broadcast %9 : vector<1x192xf32> to vector<2x192xf32>
    %11 = arith.addf %8, %10 : vector<2x192xf32>
    %c0_6 = arith.constant 0 : index
    %c0_7 = arith.constant 0 : index
    %12 = vector.load %arg4[%c0_6, %c0_7] : memref<2x192xf32, #tpu.memory_space<vmem>>, vector<2x192xf32>
    tpu.vector_store %arg4[%c0_6, %c0_7], %11 {strides = array<i32>} : memref<2x192xf32, #tpu.memory_space<vmem>>, vector<2x192xf32>,
    return
  }
  func.func @transform_0(%arg0: i32) -> (i32, i32) {
    %c0_i32 = arith.constant 0 : i32
    %c0_i32_0 = arith.constant 0 : i32
    %c0_i32_1 = arith.constant 0 : i32
    return %c0_i32, %c0_i32_0 : i32, i32
  }
  func.func @transform_1(%arg0: i32) -> (i32, i32) {
    %c0_i32 = arith.constant 0 : i32
    %c0_i32_0 = arith.constant 0 : i32
    return %arg0, %c0_i32 : i32, i32
  }
  func.func @transform_2(%arg0: i32) -> (i32, i32) {
    %c0_i32 = arith.constant 0 : i32
    %c0_i32_0 = arith.constant 0 : i32
    return %c0_i32, %arg0 : i32, i32
  }
  func.func @transform_3(%arg0: i32) -> (i32, i32) {
    %c0_i32 = arith.constant 0 : i32
    %c0_i32_0 = arith.constant 0 : i32
    return %c0_i32, %arg0 : i32, i32
  }
}

</mosaic_0001>

<llo_original>
// kernel: tpu_custom_call.1
$region0: #{tpu_custom_call.1}
  #allocation0 [shape = 'u32[]', space=smem, size = 0x4, offset = 0x4, fixed_abs, tag = 'smem constant byte address 0x4 - core index']
  #allocation1 [shape = 'u32[72,128]{1,0:T(1,128)}', space=vmem, size = 0x9000, scoped, tag = 'internal scratch']
  %s0 = inlined_call_operand.vmem [shape: f32[2,32], index: 0, kind: input, shape index: {}]
  %s1 = inlined_call_operand.vmem [shape: f32[192,32], index: 1, kind: input, shape index: {}]
  %s2 = inlined_call_operand.vmem [shape: f32[1,192], index: 2, kind: input, shape index: {}]
  %s3 = inlined_call_operand.hbm [shape: f32[2,192], index: 3, kind: output, shape index: {}]
  %s4 = sld [smem:[#allocation0]]
  $region22: #{tpu_custom_call.1} parent=0
    _
  %s6 = ssub.s32 1, %s4
  %s7 = scalar_select 0, %s6, %s4
  $region1: #{tpu_custom_call.1} parent=0
    #allocation2 [shape = 'u8[2048]{0}', space=vmem, size = 0x800, scoped, tag = 'output window, operand 0, single buffered']
    #allocation3 [shape = 's32[1]{0}', space=sflag, size = 0x4, scoped, tag = 'scoped memory for tpu_custom_call.1']
    %8 = vsyncpa [#allocation3], 0
    // Predicated region
    $region2: #{tpu_custom_call.1} parent=1 // pred_check
      _
    $region3: #{tpu_custom_call.1} parent=1 // pred_check_branch
      %10 = sbr.rel (0) target = $region5
    $region4: #{tpu_custom_call.1} parent=1 // pred_region
      _
    $region5: #{tpu_custom_call.1} parent=1 // pred_fallthru
      _
    // Predicated region
    $region6: #{tpu_custom_call.1} parent=1 // pred_check
      _
    $region7: #{tpu_custom_call.1} parent=1 // pred_check_branch
      %12 = sbr.rel (0) target = $region9
    $region8: #{tpu_custom_call.1} parent=1 // pred_region
      _
    $region9: #{tpu_custom_call.1} parent=1 // pred_fallthru
      _
    // Predicated region
    $region10: #{tpu_custom_call.1} parent=1 // pred_check
      _
    $region11: #{tpu_custom_call.1} parent=1 // pred_check_branch
      %14 = sbr.rel (0) target = $region13
    $region12: #{tpu_custom_call.1} parent=1 // pred_region
      _
    $region13: #{tpu_custom_call.1} parent=1 // pred_fallthru
      _
    %v15 = vld [vmem:[%s0] sm:$0x3]
    %v16 = vxor.u32 %v15, 2147483648
    %v17 = vmul.f32 %v16, 1.442695
    %v18 = vpow.pop %v17
    %v19 = vadd.f32 %v18, 1.0
    %v20 = vrcp.pop %v19
    %v21 = vmul.f32 %v19, %v20
    %v22 = vsub.f32 1.0, %v21
    %v23 = vmul.f32 %v20, %v22
    %v24 = vadd.f32 %v20, %v23
    %vm25 = vweird.f32 %v19
    %vm26 = vweird.f32 %v20
    %vm27 = vmor %vm25, %vm26
    %v28 = vsel %vm27, %v20, %v24
    %v29 = vand.u32 2147483647, %v19
    %vm30 = vcmp.eq.f32.partialorder %v29, 8.507059e+37
    %v31 = vand.u32 %v19, 2147483648
    %v32 = vor.u32 1.1754944e-38, %v31
    %v33 = vsel %vm30, %v32, %v28
    %v34 = vmul.f32 1.0, %v33
    %v35 = vmul.f32 %v15, %v34
    %v36 = vld [vmem:[%s1] sm:$0xff]
    %v37 = vld [vmem:[%s1 + $0x8] sm:$0xff]
    %v38 = vld [vmem:[%s1 + $0x10] sm:$0xff]
    %v39 = vld [vmem:[%s1 + $0x18] sm:$0xff]
    %v40 = vld [vmem:[%s1 + $0x20] sm:$0xff]
    %v41 = vld [vmem:[%s1 + $0x28] sm:$0xff]
    %v42 = vld [vmem:[%s1 + $0x30] sm:$0xff]
    %v43 = vld [vmem:[%s1 + $0x38] sm:$0xff]
    %v44 = vld [vmem:[%s1 + $0x40] sm:$0xff]
    %v45 = vld [vmem:[%s1 + $0x48] sm:$0xff]
    %v46 = vld [vmem:[%s1 + $0x50] sm:$0xff]
    %v47 = vld [vmem:[%s1 + $0x58] sm:$0xff]
    %v48 = vld [vmem:[%s1 + $0x60] sm:$0xff]
    %v49 = vld [vmem:[%s1 + $0x68] sm:$0xff]
    %v50 = vld [vmem:[%s1 + $0x70] sm:$0xff]
    %v51 = vld [vmem:[%s1 + $0x78] sm:$0xff]
    %v52 = vld [vmem:[%s1 + $0x80] sm:$0xff]
    %v53 = vld [vmem:[%s1 + $0x88] sm:$0xff]
    %v54 = vld [vmem:[%s1 + $0x90] sm:$0xff]
    %v55 = vld [vmem:[%s1 + $0x98] sm:$0xff]
    %v56 = vld [vmem:[%s1 + $0xa0] sm:$0xff]
    %v57 = vld [vmem:[%s1 + $0xa8] sm:$0xff]
    %v58 = vld [vmem:[%s1 + $0xb0] sm:$0xff]
    %v59 = vld [vmem:[%s1 + $0xb8] sm:$0xff]
    %v60 = vld [vmem:[%s2] sm:$0x3]
    %v62 = vperm.slane %v60, 0
    %v63 = vperm.slane %v60, 1
    %vm66 = vcmask 261120
    %v68 = vsel %vm66, %v35, 0
    %v71 = vsel %vm66, %v36, 0
    %v74 = vsel %vm66, %v37, 0
    %v77 = vsel %vm66, %v38, 0
    %v80 = vsel %vm66, %v39, 0
    %v83 = vsel %vm66, %v40, 0
    %v86 = vsel %vm66, %v41, 0
    %v89 = vsel %vm66, %v42, 0
    %v92 = vsel %vm66, %v43, 0
    %v95 = vsel %vm66, %v44, 0
    %v98 = vsel %vm66, %v45, 0
    %v101 = vsel %vm66, %v46, 0
    %v104 = vsel %vm66, %v47, 0
    %v107 = vsel %vm66, %v48, 0
    %v110 = vsel %vm66, %v49, 0
    %v113 = vsel %vm66, %v50, 0
    %v116 = vsel %vm66, %v51, 0
    %v119 = vsel %vm66, %v52, 0
    %v122 = vsel %vm66, %v53, 0
    %v125 = vsel %vm66, %v54, 0
    %v128 = vsel %vm66, %v55, 0
    %v131 = vsel %vm66, %v56, 0
    %v134 = vsel %vm66, %v57, 0
    %v137 = vsel %vm66, %v58, 0
    %v140 = vsel %vm66, %v59, 0
    %v142 = vand.u32 %v116, 4294901760
    %143 = vmatpush.xpose.msra.mxu0 %v142
    %v144 = vand.u32 %v113, 4294901760
    %145 = vmatpush.xpose.msra.mxu0 %v144
    %v146 = vand.u32 %v110, 4294901760
    %147 = vmatpush.xpose.msra.mxu0 %v146
    %v148 = vand.u32 %v107, 4294901760
    %149 = vmatpush.xpose.msra.mxu0 %v148
    %v150 = vand.u32 %v104, 4294901760
    %151 = vmatpush.xpose.msra.mxu0 %v150
    %v152 = vand.u32 %v101, 4294901760
    %153 = vmatpush.xpose.msra.mxu0 %v152
    %v154 = vand.u32 %v98, 4294901760
    %155 = vmatpush.xpose.msra.mxu0 %v154
    %v156 = vand.u32 %v95, 4294901760
    %157 = vmatpush.xpose.msra.mxu0 %v156
    %v158 = vand.u32 %v92, 4294901760
    %159 = vmatpush.xpose.msra.mxu0 %v158
    %v160 = vand.u32 %v89, 4294901760
    %161 = vmatpush.xpose.msra.mxu0 %v160
    %v162 = vand.u32 %v86, 4294901760
    %163 = vmatpush.xpose.msra.mxu0 %v162
    %v164 = vand.u32 %v83, 4294901760
    %165 = vmatpush.xpose.msra.mxu0 %v164
    %v166 = vand.u32 %v80, 4294901760
    %167 = vmatpush.xpose.msra.mxu0 %v166
    %v168 = vand.u32 %v77, 4294901760
    %169 = vmatpush.xpose.msra.mxu0 %v168
    %v170 = vand.u32 %v74, 4294901760
    %171 = vmatpush.xpose.msra.mxu0 %v170
    %v172 = vand.u32 %v71, 4294901760
    %173 = vmatpush.xpose.msra.mxu0 %v172
    %v174 = vand.u32 %v68, 4294901760
    %v175 = vsub.f32 %v68, %v174
    %v176 = vand.u32 %v175, 4294901760
    %v177 = vsub.f32 %v175, %v176
    %v178 = vand.u32 %v177, 4294901760
    %179 = vmatmul.f32.gmra.mxu0 %v178
    %v180 = vpop.f32.mrf.mxu0
    %v181 = vadd.f32 %v62, %v180
    %182 = vdwg.mxu0
    %v183 = vand.u32 %v116, 4294901760
    %v184 = vsub.f32 %v116, %v183
    %v185 = vand.u32 %v184, 4294901760
    %v186 = vsub.f32 %v184, %v185
    %v187 = vand.u32 %v186, 4294901760
    %188 = vmatpush.xpose.msra.mxu0 %v187
    %v189 = vand.u32 %v113, 4294901760
    %v190 = vsub.f32 %v113, %v189
    %v191 = vand.u32 %v190, 4294901760
    %v192 = vsub.f32 %v190, %v191
    %v193 = vand.u32 %v192, 4294901760
    %194 = vmatpush.xpose.msra.mxu0 %v193
    %v195 = vand.u32 %v110, 4294901760
    %v196 = vsub.f32 %v110, %v195
    %v197 = vand.u32 %v196, 4294901760
    %v198 = vsub.f32 %v196, %v197
    %v199 = vand.u32 %v198, 4294901760
    %200 = vmatpush.xpose.msra.mxu0 %v199
    %v201 = vand.u32 %v107, 4294901760
    %v202 = vsub.f32 %v107, %v201
    %v203 = vand.u32 %v202, 4294901760
    %v204 = vsub.f32 %v202, %v203
    %v205 = vand.u32 %v204, 4294901760
    %206 = vmatpush.xpose.msra.mxu0 %v205
    %v207 = vand.u32 %v104, 4294901760
    %v208 = vsub.f32 %v104, %v207
    %v209 = vand.u32 %v208, 4294901760
    %v210 = vsub.f32 %v208, %v209
    %v211 = vand.u32 %v210, 4294901760
    %212 = vmatpush.xpose.msra.mxu0 %v211
    %v213 = vand.u32 %v101, 4294901760
    %v214 = vsub.f32 %v101, %v213
    %v215 = vand.u32 %v214, 4294901760
    %v216 = vsub.f32 %v214, %v215
    %v217 = vand.u32 %v216, 4294901760
    %218 = vmatpush.xpose.msra.mxu0 %v217
    %v219 = vand.u32 %v98, 4294901760
    %v220 = vsub.f32 %v98, %v219
    %v221 = vand.u32 %v220, 4294901760
    %v222 = vsub.f32 %v220, %v221
    %v223 = vand.u32 %v222, 4294901760
    %224 = vmatpush.xpose.msra.mxu0 %v223
    %v225 = vand.u32 %v95, 4294901760
    %v226 = vsub.f32 %v95, %v225
    %v227 = vand.u32 %v226, 4294901760
    %v228 = vsub.f32 %v226, %v227
    %v229 = vand.u32 %v228, 4294901760
    %230 = vmatpush.xpose.msra.mxu0 %v229
    %v231 = vand.u32 %v92, 4294901760
    %v232 = vsub.f32 %v92, %v231
    %v233 = vand.u32 %v232, 4294901760
    %v234 = vsub.f32 %v232, %v233
    %v235 = vand.u32 %v234, 4294901760
    %236 = vmatpush.xpose.msra.mxu0 %v235
    %v237 = vand.u32 %v89, 4294901760
    %v238 = vsub.f32 %v89, %v237
    %v239 = vand.u32 %v238, 4294901760
    %v240 = vsub.f32 %v238, %v239
    %v241 = vand.u32 %v240, 4294901760
    %242 = vmatpush.xpose.msra.mxu0 %v241
    %v243 = vand.u32 %v86, 4294901760
    %v244 = vsub.f32 %v86, %v243
    %v245 = vand.u32 %v244, 4294901760
    %v246 = vsub.f32 %v244, %v245
    %v247 = vand.u32 %v246, 4294901760
    %248 = vmatpush.xpose.msra.mxu0 %v247
    %v249 = vand.u32 %v83, 4294901760
    %v250 = vsub.f32 %v83, %v249
    %v251 = vand.u32 %v250, 4294901760
    %v252 = vsub.f32 %v250, %v251
    %v253 = vand.u32 %v252, 4294901760
    %254 = vmatpush.xpose.msra.mxu0 %v253
    %v255 = vand.u32 %v80, 4294901760
    %v256 = vsub.f32 %v80, %v255
    %v257 = vand.u32 %v256, 4294901760
    %v258 = vsub.f32 %v256, %v257
    %v259 = vand.u32 %v258, 4294901760
    %260 = vmatpush.xpose.msra.mxu0 %v259
    %v261 = vand.u32 %v77, 4294901760
    %v262 = vsub.f32 %v77, %v261
    %v263 = vand.u32 %v262, 4294901760
    %v264 = vsub.f32 %v262, %v263
    %v265 = vand.u32 %v264, 4294901760
    %266 = vmatpush.xpose.msra.mxu0 %v265
    %v267 = vand.u32 %v74, 4294901760
    %v268 = vsub.f32 %v74, %v267
    %v269 = vand.u32 %v268, 4294901760
    %v270 = vsub.f32 %v268, %v269
    %v271 = vand.u32 %v270, 4294901760
    %272 = vmatpush.xpose.msra.mxu0 %v271
    %v273 = vand.u32 %v71, 4294901760
    %v274 = vsub.f32 %v71, %v273
    %v275 = vand.u32 %v274, 4294901760
    %v276 = vsub.f32 %v274, %v275
    %v277 = vand.u32 %v276, 4294901760
    %278 = vmatpush.xpose.msra.mxu0 %v277
    %v279 = vand.u32 %v68, 4294901760
    %280 = vmatmul.f32.gmra.mxu0 %v279
    %v281 = vpop.f32.mrf.mxu0
    %v282 = vadd.f32 %v181, %v281
    %283 = vdwg.mxu0
    %v284 = vand.u32 %v116, 4294901760
    %v285 = vsub.f32 %v116, %v284
    %286 = vmatpush.xpose.msra.mxu0 %v285
    %v287 = vand.u32 %v113, 4294901760
    %v288 = vsub.f32 %v113, %v287
    %289 = vmatpush.xpose.msra.mxu0 %v288
    %v290 = vand.u32 %v110, 4294901760
    %v291 = vsub.f32 %v110, %v290
    %292 = vmatpush.xpose.msra.mxu0 %v291
    %v293 = vand.u32 %v107, 4294901760
    %v294 = vsub.f32 %v107, %v293
    %295 = vmatpush.xpose.msra.mxu0 %v294
    %v296 = vand.u32 %v104, 4294901760
    %v297 = vsub.f32 %v104, %v296
    %298 = vmatpush.xpose.msra.mxu0 %v297
    %v299 = vand.u32 %v101, 4294901760
    %v300 = vsub.f32 %v101, %v299
    %301 = vmatpush.xpose.msra.mxu0 %v300
    %v302 = vand.u32 %v98, 4294901760
    %v303 = vsub.f32 %v98, %v302
    %304 = vmatpush.xpose.msra.mxu0 %v303
    %v305 = vand.u32 %v95, 4294901760
    %v306 = vsub.f32 %v95, %v305
    %307 = vmatpush.xpose.msra.mxu0 %v306
    %v308 = vand.u32 %v92, 4294901760
    %v309 = vsub.f32 %v92, %v308
    %310 = vmatpush.xpose.msra.mxu0 %v309
    %v311 = vand.u32 %v89, 4294901760
    %v312 = vsub.f32 %v89, %v311
    %313 = vmatpush.xpose.msra.mxu0 %v312
    %v314 = vand.u32 %v86, 4294901760
    %v315 = vsub.f32 %v86, %v314
    %316 = vmatpush.xpose.msra.mxu0 %v315
    %v317 = vand.u32 %v83, 4294901760
    %v318 = vsub.f32 %v83, %v317
    %319 = vmatpush.xpose.msra.mxu0 %v318
    %v320 = vand.u32 %v80, 4294901760
    %v321 = vsub.f32 %v80, %v320
    %322 = vmatpush.xpose.msra.mxu0 %v321
    %v323 = vand.u32 %v77, 4294901760
    %v324 = vsub.f32 %v77, %v323
    %325 = vmatpush.xpose.msra.mxu0 %v324
    %v326 = vand.u32 %v74, 4294901760
    %v327 = vsub.f32 %v74, %v326
    %328 = vmatpush.xpose.msra.mxu0 %v327
    %v329 = vand.u32 %v71, 4294901760
    %v330 = vsub.f32 %v71, %v329
    %331 = vmatpush.xpose.msra.mxu0 %v330
    %v332 = vand.u32 %v68, 4294901760
    %v333 = vsub.f32 %v68, %v332
    %334 = vmatmul.f32.gmra.mxu0 %v333
    %v335 = vpop.f32.mrf.mxu0
    %v336 = vadd.f32 %v282, %v335
    %337 = vdwg.mxu0
    %v338 = vand.u32 %v116, 4294901760
    %339 = vmatpush.xpose.msra.mxu0 %v338
    %v340 = vand.u32 %v113, 4294901760
    %341 = vmatpush.xpose.msra.mxu0 %v340
    %v342 = vand.u32 %v110, 4294901760
    %343 = vmatpush.xpose.msra.mxu0 %v342
    %v344 = vand.u32 %v107, 4294901760
    %345 = vmatpush.xpose.msra.mxu0 %v344
    %v346 = vand.u32 %v104, 4294901760
    %347 = vmatpush.xpose.msra.mxu0 %v346
    %v348 = vand.u32 %v101, 4294901760
    %349 = vmatpush.xpose.msra.mxu0 %v348
    %v350 = vand.u32 %v98, 4294901760
    %351 = vmatpush.xpose.msra.mxu0 %v350
    %v352 = vand.u32 %v95, 4294901760
    %353 = vmatpush.xpose.msra.mxu0 %v352
    %v354 = vand.u32 %v92, 4294901760
    %355 = vmatpush.xpose.msra.mxu0 %v354
    %v356 = vand.u32 %v89, 4294901760
    %357 = vmatpush.xpose.msra.mxu0 %v356
    %v358 = vand.u32 %v86, 4294901760
    %359 = vmatpush.xpose.msra.mxu0 %v358
    %v360 = vand.u32 %v83, 4294901760
    %361 = vmatpush.xpose.msra.mxu0 %v360
    %v362 = vand.u32 %v80, 4294901760
    %363 = vmatpush.xpose.msra.mxu0 %v362
    %v364 = vand.u32 %v77, 4294901760
    %365 = vmatpush.xpose.msra.mxu0 %v364
    %v366 = vand.u32 %v74, 4294901760
    %367 = vmatpush.xpose.msra.mxu0 %v366
    %v368 = vand.u32 %v71, 4294901760
    %369 = vmatpush.xpose.msra.mxu0 %v368
    %v370 = vand.u32 %v68, 4294901760
    %v371 = vsub.f32 %v68, %v370
    %v372 = vand.u32 %v371, 4294901760
    %373 = vmatmul.f32.gmra.mxu0 %v372
    %v374 = vpop.f32.mrf.mxu0
    %v375 = vadd.f32 %v336, %v374
    %376 = vdwg.mxu0
    %v377 = vand.u32 %v116, 4294901760
    %v378 = vsub.f32 %v116, %v377
    %v379 = vand.u32 %v378, 4294901760
    %380 = vmatpush.xpose.msra.mxu0 %v379
    %v381 = vand.u32 %v113, 4294901760
    %v382 = vsub.f32 %v113, %v381
    %v383 = vand.u32 %v382, 4294901760
    %384 = vmatpush.xpose.msra.mxu0 %v383
    %v385 = vand.u32 %v110, 4294901760
    %v386 = vsub.f32 %v110, %v385
    %v387 = vand.u32 %v386, 4294901760
    %388 = vmatpush.xpose.msra.mxu0 %v387
    %v389 = vand.u32 %v107, 4294901760
    %v390 = vsub.f32 %v107, %v389
    %v391 = vand.u32 %v390, 4294901760
    %392 = vmatpush.xpose.msra.mxu0 %v391
    %v393 = vand.u32 %v104, 4294901760
    %v394 = vsub.f32 %v104, %v393
    %v395 = vand.u32 %v394, 4294901760
    %396 = vmatpush.xpose.msra.mxu0 %v395
    %v397 = vand.u32 %v101, 4294901760
    %v398 = vsub.f32 %v101, %v397
    %v399 = vand.u32 %v398, 4294901760
    %400 = vmatpush.xpose.msra.mxu0 %v399
    %v401 = vand.u32 %v98, 4294901760
    %v402 = vsub.f32 %v98, %v401
    %v403 = vand.u32 %v402, 4294901760
    %404 = vmatpush.xpose.msra.mxu0 %v403
    %v405 = vand.u32 %v95, 4294901760
    %v406 = vsub.f32 %v95, %v405
    %v407 = vand.u32 %v406, 4294901760
    %408 = vmatpush.xpose.msra.mxu0 %v407
    %v409 = vand.u32 %v92, 4294901760
    %v410 = vsub.f32 %v92, %v409
    %v411 = vand.u32 %v410, 4294901760
    %412 = vmatpush.xpose.msra.mxu0 %v411
    %v413 = vand.u32 %v89, 4294901760
    %v414 = vsub.f32 %v89, %v413
    %v415 = vand.u32 %v414, 4294901760
    %416 = vmatpush.xpose.msra.mxu0 %v415
    %v417 = vand.u32 %v86, 4294901760
    %v418 = vsub.f32 %v86, %v417
    %v419 = vand.u32 %v418, 4294901760
    %420 = vmatpush.xpose.msra.mxu0 %v419
    %v421 = vand.u32 %v83, 4294901760
    %v422 = vsub.f32 %v83, %v421
    %v423 = vand.u32 %v422, 4294901760
    %424 = vmatpush.xpose.msra.mxu0 %v423
    %v425 = vand.u32 %v80, 4294901760
    %v426 = vsub.f32 %v80, %v425
    %v427 = vand.u32 %v426, 4294901760
    %428 = vmatpush.xpose.msra.mxu0 %v427
    %v429 = vand.u32 %v77, 4294901760
    %v430 = vsub.f32 %v77, %v429
    %v431 = vand.u32 %v430, 4294901760
    %432 = vmatpush.xpose.msra.mxu0 %v431
    %v433 = vand.u32 %v74, 4294901760
    %v434 = vsub.f32 %v74, %v433
    %v435 = vand.u32 %v434, 4294901760
    %436 = vmatpush.xpose.msra.mxu0 %v435
    %v437 = vand.u32 %v71, 4294901760
    %v438 = vsub.f32 %v71, %v437
    %v439 = vand.u32 %v438, 4294901760
    %440 = vmatpush.xpose.msra.mxu0 %v439
    %v441 = vand.u32 %v68, 4294901760
    %442 = vmatmul.f32.gmra.mxu0 %v441
    %v443 = vpop.f32.mrf.mxu0
    %v444 = vadd.f32 %v375, %v443
    %445 = vdwg.mxu0
    %v446 = vand.u32 %v116, 4294901760
    %447 = vmatpush.xpose.msra.mxu0 %v446
    %v448 = vand.u32 %v113, 4294901760
    %449 = vmatpush.xpose.msra.mxu0 %v448
    %v450 = vand.u32 %v110, 4294901760
    %451 = vmatpush.xpose.msra.mxu0 %v450
    %v452 = vand.u32 %v107, 4294901760
    %453 = vmatpush.xpose.msra.mxu0 %v452
    %v454 = vand.u32 %v104, 4294901760
    %455 = vmatpush.xpose.msra.mxu0 %v454
    %v456 = vand.u32 %v101, 4294901760
    %457 = vmatpush.xpose.msra.mxu0 %v456
    %v458 = vand.u32 %v98, 4294901760
    %459 = vmatpush.xpose.msra.mxu0 %v458
    %v460 = vand.u32 %v95, 4294901760
    %461 = vmatpush.xpose.msra.mxu0 %v460
    %v462 = vand.u32 %v92, 4294901760
    %463 = vmatpush.xpose.msra.mxu0 %v462
    %v464 = vand.u32 %v89, 4294901760
    %465 = vmatpush.xpose.msra.mxu0 %v464
    %v466 = vand.u32 %v86, 4294901760
    %467 = vmatpush.xpose.msra.mxu0 %v466
    %v468 = vand.u32 %v83, 4294901760
    %469 = vmatpush.xpose.msra.mxu0 %v468
    %v470 = vand.u32 %v80, 4294901760
    %471 = vmatpush.xpose.msra.mxu0 %v470
    %v472 = vand.u32 %v77, 4294901760
    %473 = vmatpush.xpose.msra.mxu0 %v472
    %v474 = vand.u32 %v74, 4294901760
    %475 = vmatpush.xpose.msra.mxu0 %v474
    %v476 = vand.u32 %v71, 4294901760
    %477 = vmatpush.xpose.msra.mxu0 %v476
    %v478 = vand.u32 %v68, 4294901760
    %479 = vmatmul.f32.gmra.mxu0 %v478
    %v480 = vpop.f32.mrf.mxu0
    %v481 = vadd.f32 %v444, %v480
    %482 = vdwg.mxu0
    %483 = vmatpush.xpose.msra.mxu0 0.0
    %484 = vmatpush.xpose.msra.mxu0 0.0
    %485 = vmatpush.xpose.msra.mxu0 0.0
    %486 = vmatpush.xpose.msra.mxu0 0.0
    %487 = vmatpush.xpose.msra.mxu0 0.0
    %488 = vmatpush.xpose.msra.mxu0 0.0
    %489 = vmatpush.xpose.msra.mxu0 0.0
    %490 = vmatpush.xpose.msra.mxu0 0.0
    %v491 = vand.u32 %v140, 4294901760
    %492 = vmatpush.xpose.msra.mxu0 %v491
    %v493 = vand.u32 %v137, 4294901760
    %494 = vmatpush.xpose.msra.mxu0 %v493
    %v495 = vand.u32 %v134, 4294901760
    %496 = vmatpush.xpose.msra.mxu0 %v495
    %v497 = vand.u32 %v131, 4294901760
    %498 = vmatpush.xpose.msra.mxu0 %v497
    %v499 = vand.u32 %v128, 4294901760
    %500 = vmatpush.xpose.msra.mxu0 %v499
    %v501 = vand.u32 %v125, 4294901760
    %502 = vmatpush.xpose.msra.mxu0 %v501
    %v503 = vand.u32 %v122, 4294901760
    %504 = vmatpush.xpose.msra.mxu0 %v503
    %v505 = vand.u32 %v119, 4294901760
    %506 = vmatpush.xpose.msra.mxu0 %v505
    %v507 = vand.u32 %v68, 4294901760
    %v508 = vsub.f32 %v68, %v507
    %v509 = vand.u32 %v508, 4294901760
    %v510 = vsub.f32 %v508, %v509
    %v511 = vand.u32 %v510, 4294901760
    %512 = vmatmul.f32.gmra.mxu0 %v511
    %v513 = vpop.f32.mrf.mxu0
    %v514 = vadd.f32 %v63, %v513
    %515 = vdwg.mxu0
    %516 = vmatpush.xpose.msra.mxu0 0.0
    %517 = vmatpush.xpose.msra.mxu0 0.0
    %518 = vmatpush.xpose.msra.mxu0 0.0
    %519 = vmatpush.xpose.msra.mxu0 0.0
    %520 = vmatpush.xpose.msra.mxu0 0.0
    %521 = vmatpush.xpose.msra.mxu0 0.0
    %522 = vmatpush.xpose.msra.mxu0 0.0
    %523 = vmatpush.xpose.msra.mxu0 0.0
    %v524 = vand.u32 %v140, 4294901760
    %v525 = vsub.f32 %v140, %v524
    %v526 = vand.u32 %v525, 4294901760
    %v527 = vsub.f32 %v525, %v526
    %v528 = vand.u32 %v527, 4294901760
    %529 = vmatpush.xpose.msra.mxu0 %v528
    %v530 = vand.u32 %v137, 4294901760
    %v531 = vsub.f32 %v137, %v530
    %v532 = vand.u32 %v531, 4294901760
    %v533 = vsub.f32 %v531, %v532
    %v534 = vand.u32 %v533, 4294901760
    %535 = vmatpush.xpose.msra.mxu0 %v534
    %v536 = vand.u32 %v134, 4294901760
    %v537 = vsub.f32 %v134, %v536
    %v538 = vand.u32 %v537, 4294901760
    %v539 = vsub.f32 %v537, %v538
    %v540 = vand.u32 %v539, 4294901760
    %541 = vmatpush.xpose.msra.mxu0 %v540
    %v542 = vand.u32 %v131, 4294901760
    %v543 = vsub.f32 %v131, %v542
    %v544 = vand.u32 %v543, 4294901760
    %v545 = vsub.f32 %v543, %v544
    %v546 = vand.u32 %v545, 4294901760
    %547 = vmatpush.xpose.msra.mxu0 %v546
    %v548 = vand.u32 %v128, 4294901760
    %v549 = vsub.f32 %v128, %v548
    %v550 = vand.u32 %v549, 4294901760
    %v551 = vsub.f32 %v549, %v550
    %v552 = vand.u32 %v551, 4294901760
    %553 = vmatpush.xpose.msra.mxu0 %v552
    %v554 = vand.u32 %v125, 4294901760
    %v555 = vsub.f32 %v125, %v554
    %v556 = vand.u32 %v555, 4294901760
    %v557 = vsub.f32 %v555, %v556
    %v558 = vand.u32 %v557, 4294901760
    %559 = vmatpush.xpose.msra.mxu0 %v558
    %v560 = vand.u32 %v122, 4294901760
    %v561 = vsub.f32 %v122, %v560
    %v562 = vand.u32 %v561, 4294901760
    %v563 = vsub.f32 %v561, %v562
    %v564 = vand.u32 %v563, 4294901760
    %565 = vmatpush.xpose.msra.mxu0 %v564
    %v566 = vand.u32 %v119, 4294901760
    %v567 = vsub.f32 %v119, %v566
    %v568 = vand.u32 %v567, 4294901760
    %v569 = vsub.f32 %v567, %v568
    %v570 = vand.u32 %v569, 4294901760
    %571 = vmatpush.xpose.msra.mxu0 %v570
    %v572 = vand.u32 %v68, 4294901760
    %573 = vmatmul.f32.gmra.mxu0 %v572
    %v574 = vpop.f32.mrf.mxu0
    %v575 = vadd.f32 %v514, %v574
    %576 = vdwg.mxu0
    %577 = vmatpush.xpose.msra.mxu0 0.0
    %578 = vmatpush.xpose.msra.mxu0 0.0
    %579 = vmatpush.xpose.msra.mxu0 0.0
    %580 = vmatpush.xpose.msra.mxu0 0.0
    %581 = vmatpush.xpose.msra.mxu0 0.0
    %582 = vmatpush.xpose.msra.mxu0 0.0
    %583 = vmatpush.xpose.msra.mxu0 0.0
    %584 = vmatpush.xpose.msra.mxu0 0.0
    %v585 = vand.u32 %v140, 4294901760
    %v586 = vsub.f32 %v140, %v585
    %587 = vmatpush.xpose.msra.mxu0 %v586
    %v588 = vand.u32 %v137, 4294901760
    %v589 = vsub.f32 %v137, %v588
    %590 = vmatpush.xpose.msra.mxu0 %v589
    %v591 = vand.u32 %v134, 4294901760
    %v592 = vsub.f32 %v134, %v591
    %593 = vmatpush.xpose.msra.mxu0 %v592
    %v594 = vand.u32 %v131, 4294901760
    %v595 = vsub.f32 %v131, %v594
    %596 = vmatpush.xpose.msra.mxu0 %v595
    %v597 = vand.u32 %v128, 4294901760
    %v598 = vsub.f32 %v128, %v597
    %599 = vmatpush.xpose.msra.mxu0 %v598
    %v600 = vand.u32 %v125, 4294901760
    %v601 = vsub.f32 %v125, %v600
    %602 = vmatpush.xpose.msra.mxu0 %v601
    %v603 = vand.u32 %v122, 4294901760
    %v604 = vsub.f32 %v122, %v603
    %605 = vmatpush.xpose.msra.mxu0 %v604
    %v606 = vand.u32 %v119, 4294901760
    %v607 = vsub.f32 %v119, %v606
    %608 = vmatpush.xpose.msra.mxu0 %v607
    %v609 = vand.u32 %v68, 4294901760
    %v610 = vsub.f32 %v68, %v609
    %611 = vmatmul.f32.gmra.mxu0 %v610
    %v612 = vpop.f32.mrf.mxu0
    %v613 = vadd.f32 %v575, %v612
    %614 = vdwg.mxu0
    %615 = vmatpush.xpose.msra.mxu0 0.0
    %616 = vmatpush.xpose.msra.mxu0 0.0
    %617 = vmatpush.xpose.msra.mxu0 0.0
    %618 = vmatpush.xpose.msra.mxu0 0.0
    %619 = vmatpush.xpose.msra.mxu0 0.0
    %620 = vmatpush.xpose.msra.mxu0 0.0
    %621 = vmatpush.xpose.msra.mxu0 0.0
    %622 = vmatpush.xpose.msra.mxu0 0.0
    %v623 = vand.u32 %v140, 4294901760
    %624 = vmatpush.xpose.msra.mxu0 %v623
    %v625 = vand.u32 %v137, 4294901760
    %626 = vmatpush.xpose.msra.mxu0 %v625
    %v627 = vand.u32 %v134, 4294901760
    %628 = vmatpush.xpose.msra.mxu0 %v627
    %v629 = vand.u32 %v131, 4294901760
    %630 = vmatpush.xpose.msra.mxu0 %v629
    %v631 = vand.u32 %v128, 4294901760
    %632 = vmatpush.xpose.msra.mxu0 %v631
    %v633 = vand.u32 %v125, 4294901760
    %634 = vmatpush.xpose.msra.mxu0 %v633
    %v635 = vand.u32 %v122, 4294901760
    %636 = vmatpush.xpose.msra.mxu0 %v635
    %v637 = vand.u32 %v119, 4294901760
    %638 = vmatpush.xpose.msra.mxu0 %v637
    %v639 = vand.u32 %v68, 4294901760
    %v640 = vsub.f32 %v68, %v639
    %v641 = vand.u32 %v640, 4294901760
    %642 = vmatmul.f32.gmra.mxu0 %v641
    %v643 = vpop.f32.mrf.mxu0
    %v644 = vadd.f32 %v613, %v643
    %645 = vdwg.mxu0
    %646 = vmatpush.xpose.msra.mxu0 0.0
    %647 = vmatpush.xpose.msra.mxu0 0.0
    %648 = vmatpush.xpose.msra.mxu0 0.0
    %649 = vmatpush.xpose.msra.mxu0 0.0
    %650 = vmatpush.xpose.msra.mxu0 0.0
    %651 = vmatpush.xpose.msra.mxu0 0.0
    %652 = vmatpush.xpose.msra.mxu0 0.0
    %653 = vmatpush.xpose.msra.mxu0 0.0
    %v654 = vand.u32 %v140, 4294901760
    %v655 = vsub.f32 %v140, %v654
    %v656 = vand.u32 %v655, 4294901760
    %657 = vmatpush.xpose.msra.mxu0 %v656
    %v658 = vand.u32 %v137, 4294901760
    %v659 = vsub.f32 %v137, %v658
    %v660 = vand.u32 %v659, 4294901760
    %661 = vmatpush.xpose.msra.mxu0 %v660
    %v662 = vand.u32 %v134, 4294901760
    %v663 = vsub.f32 %v134, %v662
    %v664 = vand.u32 %v663, 4294901760
    %665 = vmatpush.xpose.msra.mxu0 %v664
    %v666 = vand.u32 %v131, 4294901760
    %v667 = vsub.f32 %v131, %v666
    %v668 = vand.u32 %v667, 4294901760
    %669 = vmatpush.xpose.msra.mxu0 %v668
    %v670 = vand.u32 %v128, 4294901760
    %v671 = vsub.f32 %v128, %v670
    %v672 = vand.u32 %v671, 4294901760
    %673 = vmatpush.xpose.msra.mxu0 %v672
    %v674 = vand.u32 %v125, 4294901760
    %v675 = vsub.f32 %v125, %v674
    %v676 = vand.u32 %v675, 4294901760
    %677 = vmatpush.xpose.msra.mxu0 %v676
    %v678 = vand.u32 %v122, 4294901760
    %v679 = vsub.f32 %v122, %v678
    %v680 = vand.u32 %v679, 4294901760
    %681 = vmatpush.xpose.msra.mxu0 %v680
    %v682 = vand.u32 %v119, 4294901760
    %v683 = vsub.f32 %v119, %v682
    %v684 = vand.u32 %v683, 4294901760
    %685 = vmatpush.xpose.msra.mxu0 %v684
    %v686 = vand.u32 %v68, 4294901760
    %687 = vmatmul.f32.gmra.mxu0 %v686
    %v688 = vpop.f32.mrf.mxu0
    %v689 = vadd.f32 %v644, %v688
    %690 = vdwg.mxu0
    %691 = vmatpush.xpose.msra.mxu0 0.0
    %692 = vmatpush.xpose.msra.mxu0 0.0
    %693 = vmatpush.xpose.msra.mxu0 0.0
    %694 = vmatpush.xpose.msra.mxu0 0.0
    %695 = vmatpush.xpose.msra.mxu0 0.0
    %696 = vmatpush.xpose.msra.mxu0 0.0
    %697 = vmatpush.xpose.msra.mxu0 0.0
    %698 = vmatpush.xpose.msra.mxu0 0.0
    %v699 = vand.u32 %v140, 4294901760
    %700 = vmatpush.xpose.msra.mxu0 %v699
    %v701 = vand.u32 %v137, 4294901760
    %702 = vmatpush.xpose.msra.mxu0 %v701
    %v703 = vand.u32 %v134, 4294901760
    %704 = vmatpush.xpose.msra.mxu0 %v703
    %v705 = vand.u32 %v131, 4294901760
    %706 = vmatpush.xpose.msra.mxu0 %v705
    %v707 = vand.u32 %v128, 4294901760
    %708 = vmatpush.xpose.msra.mxu0 %v707
    %v709 = vand.u32 %v125, 4294901760
    %710 = vmatpush.xpose.msra.mxu0 %v709
    %v711 = vand.u32 %v122, 4294901760
    %712 = vmatpush.xpose.msra.mxu0 %v711
    %v713 = vand.u32 %v119, 4294901760
    %714 = vmatpush.xpose.msra.mxu0 %v713
    %v715 = vand.u32 %v68, 4294901760
    %716 = vmatmul.f32.gmra.mxu0 %v715
    %v717 = vpop.f32.mrf.mxu0
    %v718 = vadd.f32 %v689, %v717
    %719 = vdwg.mxu0
    %v722 = vrot.slane %v718, 6
    %vm723 = vcmask 1041408
    %v724 = vsel %vm723, %v481, %v722
    %vm726 = vcmask 519170
    %vm727 = vmor %vm726, %vm723
    %728 = vst.msk [vmem:[#allocation2] sm:$0xf] %vm727, %v724
    // Predicated region
    $region14: #{tpu_custom_call.1} parent=1 // pred_check
      _
    $region15: #{tpu_custom_call.1} parent=1 // pred_check_branch
      %730 = sbr.rel (0) target = $region17
    $region16: #{tpu_custom_call.1} parent=1 // pred_region
      %732 = vsyncadd [#allocation3], 0
      %s734 = sshll.u32 [#allocation2], 4
      %s735 = int_to_ptr.vmem [resolvable:$true] %s734
      %s736 = sshll.u32 %s3, 4
      %s737 = int_to_ptr.hbm [resolvable:$true] %s736
      %739 = dma.vmem_to_hbm [thread:$0]  %s735, 64, %s737, [#allocation3]
    $region17: #{tpu_custom_call.1} parent=1 // pred_fallthru
      _
    // Predicated region
    $region18: #{tpu_custom_call.1} parent=1 // pred_check
      _
    $region19: #{tpu_custom_call.1} parent=1 // pred_check_branch
      %741 = sbr.rel (0) target = $region21
    $region20: #{tpu_custom_call.1} parent=1 // pred_region
      %743 = dma.done [#allocation3], 64
    $region21: #{tpu_custom_call.1} parent=1 // pred_fallthru
      _
    %744 = vsyncpa [#allocation3], 1

</llo_original>
